<compile_context>
chip_gen: v5e
topology: v5e:2x2
jax: 0.10.0
libtpu: 0.0.40
codegen_flags: <defaults>
</compile_context>

<pallas_src>
import functools
import math

import jax
import jax.numpy as jnp
from jax.experimental import pallas as pl
from jax.experimental.pallas import tpu as pltpu

TB_MAX = 256  # max tokens (output rows) gathered per grid step


def _round_up(x: int, m: int) -> int:
    return (x + m - 1) // m * m


def gather_kernel(ids_ref, table_ref, out_ref, buf_ref, sem, *, scale, tb):
    # ids_ref   : SMEM (N_pad,) int32   -- scalar-prefetched token ids (clamped)
    # table_ref : HBM  (V, D_pad) f32   -- memory_space=pl.ANY, never bulk-copied
    # out_ref   : VMEM (TB, D_pad) f32  -- output tile (auto-pipelined)
    # buf_ref   : VMEM (TB, D_pad) f32  -- gather destination
    # sem       : DMA semaphore (1,)    -- shared by all row copies of this tile
    base = pl.program_id(0) * tb

    # Issue all row DMAs for this tile back-to-back; the DMA engine streams them
    # so they are effectively all in flight (issue/complete fully overlapped).
    @pl.loop(0, tb)
    def _issue(r):
        row = ids_ref[base + r]
        pltpu.make_async_copy(table_ref.at[row], buf_ref.at[r], sem.at[0]).start()

    # Retire them: each wait accounts for exactly one row's bytes on the shared
    # semaphore, so completion order does not matter.
    @pl.loop(0, tb)
    def _drain(r):
        pltpu.make_async_copy(table_ref.at[0], buf_ref.at[r], sem.at[0]).wait()

    # Single lane-dense tile-wide scale multiply (sqrt(emb_size)) + store.
    out_ref[...] = (buf_ref[...] * scale).astype(out_ref.dtype)


def token_embedding(tokens, table, *, tb_max=TB_MAX):
    """tokens: (B, S) int, table: (V, D) float32 -> (B, S, D) float32.

    out[b, s, :] = table[tokens[b, s]] * sqrt(D)   (PyTorch TokenEmbedding.forward)
    """
    B, S = tokens.shape
    V, D = table.shape
    N = B * S
    scale = math.sqrt(D)

    # Keep the output (and gathered rows) lane-dense: pad D to a multiple of 128.
    # One-time wrapper cost; a no-op for typical D (128/256/512...).
    D_pad = _round_up(D, 128)
    if D_pad != D:
        table = jnp.pad(table, ((0, 0), (0, D_pad - D)))

    # Token tile: sublane-aligned, capped so per-tile in-flight DMA count stays modest.
    tb = min(tb_max, _round_up(N, 8))
    n_pad = _round_up(N, tb)

    flat = jnp.clip(tokens.reshape(N).astype(jnp.int32), 0, V - 1)
    if n_pad != N:
        flat = jnp.pad(flat, (0, n_pad - N))  # pad rows gather row 0; trimmed below

    out_flat = pl.pallas_call(
        functools.partial(gather_kernel, scale=scale, tb=tb),
        out_shape=jax.ShapeDtypeStruct((n_pad, D_pad), table.dtype),
        grid_spec=pltpu.PrefetchScalarGridSpec(
            num_scalar_prefetch=1,                       # ids -> SMEM, visible to index_maps
            grid=(n_pad // tb,),
            in_specs=[pl.BlockSpec(memory_space=pl.ANY)],  # table stays in HBM
            out_specs=pl.BlockSpec((tb, D_pad), lambda i, ids: (i, 0)),
            scratch_shapes=[
                pltpu.VMEM((tb, D_pad), table.dtype),    # gather buffer
                pltpu.SemaphoreType.DMA((1,)),           # shared row-copy semaphore
            ],
        ),
        compiler_params=pltpu.CompilerParams(
            # Independent token tiles; shards across the 2 TCs on v7x, no-op on v5e/v6e.
            dimension_semantics=("parallel",),
        ),
    )(flat, table)

    return out_flat[:N, :D].reshape(B, S, D)


if __name__ == "__main__":
    # Small shapes consistent with the module: batch=2, seq=8, vocab=32, emb_size=128.
    B, S = 2, 8
    VOCAB, EMB = 32, 128

    key = jax.random.PRNGKey(0)
    k_tok, k_emb, k_tok2 = jax.random.split(key, 3)

    tokens = jax.random.randint(k_tok, (B, S), 0, VOCAB, dtype=jnp.int32)
    # Deterministic stand-in for nn.Embedding's N(0, 1) weight init.
    table = jax.random.normal(k_emb, (VOCAB, EMB), dtype=jnp.float32)

    out = token_embedding(tokens, table)
    out = jax.block_until_ready(out)

    ref = table[tokens] * math.sqrt(EMB)
    assert out.shape == (B, S, EMB)
    assert jnp.allclose(out, ref, atol=1e-5, rtol=1e-5), "mismatch vs reference"

    # Also exercise the padding/trim path (B*S not a multiple of 8).
    tokens2 = jax.random.randint(k_tok2, (3, 5), 0, VOCAB, dtype=jnp.int32)
    out2 = jax.block_until_ready(token_embedding(tokens2, table))
    ref2 = table[tokens2] * math.sqrt(EMB)
    assert out2.shape == (3, 5, EMB)
    assert jnp.allclose(out2, ref2, atol=1e-5, rtol=1e-5), "mismatch vs reference (padded)"

    print("KERNEL_OK")
</pallas_src>

<mosaic_0001>
module attributes {stable_mosaic.version = 11 : i64} {
  func.func @gather_kernel(%arg0: i32, %arg1: memref<16xi32, #tpu.memory_space<smem>>, %arg2: memref<32x128xf32, #tpu.memory_space<any>>, %arg3: memref<16x128xf32, #tpu.memory_space<vmem>>, %arg4: memref<16x128xf32, #tpu.memory_space<vmem>>, %arg5: memref<1x!tpu.dma_semaphore, #tpu.memory_space<semaphore_mem>>) attributes {dimension_semantics = [#tpu.dimension_semantics<parallel>], iteration_bounds = array<i64: 1>, scalar_prefetch = 1 : i64, scratch_operands = 2 : i64, tpu.core_type = #tpu.core_type<tc>, window_params = [{}, {transform_indices = @transform_1, window_bounds = array<i64: 16, 128>}]} {
    %c16_i32 = arith.constant 16 : i32
    %0 = arith.muli %arg0, %c16_i32 : i32
    %c0_i32 = arith.constant 0 : i32
    %c16_i32_0 = arith.constant 16 : i32
    %1 = arith.addi %c0_i32, %c16_i32_0 : i32
    %c1_i32 = arith.constant 1 : i32
    scf.for %arg6 = %c0_i32 to %1 step %c1_i32  : i32 {
      %c1_i32_9 = arith.constant 1 : i32
      %7 = arith.muli %arg6, %c1_i32_9 : i32
      %c0_i32_10 = arith.constant 0 : i32
      %8 = arith.addi %c0_i32_10, %7 : i32
      %9 = arith.addi %0, %8 : i32
      %10 = arith.index_cast %9 : i32 to index
      %11 = memref.load %arg1[%10] : memref<16xi32, #tpu.memory_space<smem>>
      %c0_i32_11 = arith.constant 0 : i32
      %c0_i32_12 = arith.constant 0 : i32
      %12 = tpu.memref_slice %arg2[%11, %c0_i32_12] : memref<32x128xf32, #tpu.memory_space<any>> -> memref<1x128xf32, #tpu.memory_space<any>>
      %13 = tpu.memref_squeeze %12 : memref<1x128xf32, #tpu.memory_space<any>> -> memref<128xf32, #tpu.memory_space<any>>
      %c0_i32_13 = arith.constant 0 : i32
      %14 = tpu.memref_slice %arg4[%8, %c0_i32_13] : memref<16x128xf32, #tpu.memory_space<vmem>> -> memref<1x128xf32, #tpu.memory_space<vmem>>
      %15 = tpu.memref_squeeze %14 : memref<1x128xf32, #tpu.memory_space<vmem>> -> memref<128xf32, #tpu.memory_space<vmem>>
      %16 = tpu.memref_slice %arg5[%c0_i32_11] : memref<1x!tpu.dma_semaphore, #tpu.memory_space<semaphore_mem>> -> memref<1x!tpu.dma_semaphore, #tpu.memory_space<semaphore_mem>>
      %17 = tpu.memref_squeeze %16 : memref<1x!tpu.dma_semaphore, #tpu.memory_space<semaphore_mem>> -> memref<!tpu.dma_semaphore, #tpu.memory_space<semaphore_mem>>
      tpu.enqueue_dma source(%13 : memref<128xf32, #tpu.memory_space<any>>) target(%15 : memref<128xf32, #tpu.memory_space<vmem>>) target_semaphore(%17 : memref<!tpu.dma_semaphore, #tpu.memory_space<semaphore_mem>>)
    }
    %c16_i32_1 = arith.constant 16 : i32
    %c0_i32_2 = arith.constant 0 : i32
    %c16_i32_3 = arith.constant 16 : i32
    %2 = arith.addi %c0_i32_2, %c16_i32_3 : i32
    %c1_i32_4 = arith.constant 1 : i32
    scf.for %arg6 = %c0_i32_2 to %2 step %c1_i32_4  : i32 {
      %c1_i32_9 = arith.constant 1 : i32
      %7 = arith.muli %arg6, %c1_i32_9 : i32
      %c0_i32_10 = arith.constant 0 : i32
      %8 = arith.addi %c0_i32_10, %7 : i32
      %c0_i32_11 = arith.constant 0 : i32
      %c0_i32_12 = arith.constant 0 : i32
      %c0_i32_13 = arith.constant 0 : i32
      %9 = tpu.memref_slice %arg2[%c0_i32_11, %c0_i32_13] : memref<32x128xf32, #tpu.memory_space<any>> -> memref<1x128xf32, #tpu.memory_space<any>>
      %10 = tpu.memref_squeeze %9 : memref<1x128xf32, #tpu.memory_space<any>> -> memref<128xf32, #tpu.memory_space<any>>
      %c0_i32_14 = arith.constant 0 : i32
      %11 = tpu.memref_slice %arg4[%8, %c0_i32_14] : memref<16x128xf32, #tpu.memory_space<vmem>> -> memref<1x128xf32, #tpu.memory_space<vmem>>
      %12 = tpu.memref_squeeze %11 : memref<1x128xf32, #tpu.memory_space<vmem>> -> memref<128xf32, #tpu.memory_space<vmem>>
      %13 = tpu.memref_slice %arg5[%c0_i32_12] : memref<1x!tpu.dma_semaphore, #tpu.memory_space<semaphore_mem>> -> memref<1x!tpu.dma_semaphore, #tpu.memory_space<semaphore_mem>>
      %14 = tpu.memref_squeeze %13 : memref<1x!tpu.dma_semaphore, #tpu.memory_space<semaphore_mem>> -> memref<!tpu.dma_semaphore, #tpu.memory_space<semaphore_mem>>
      tpu.wait_dma2 semaphore(%14 : memref<!tpu.dma_semaphore, #tpu.memory_space<semaphore_mem>>) src(%10 : memref<128xf32, #tpu.memory_space<any>>) dst(%12 : memref<128xf32, #tpu.memory_space<vmem>>)
    }
    %c16_i32_5 = arith.constant 16 : i32
    %c0 = arith.constant 0 : index
    %c0_6 = arith.constant 0 : index
    %3 = vector.load %arg4[%c0, %c0_6] : memref<16x128xf32, #tpu.memory_space<vmem>>, vector<16x128xf32>
    %cst = arith.constant 11.3137083 : f32
    %4 = vector.broadcast %cst : f32 to vector<16x128xf32>
    %5 = arith.mulf %3, %4 : vector<16x128xf32>
    %c0_7 = arith.constant 0 : index
    %c0_8 = arith.constant 0 : index
    %6 = vector.load %arg3[%c0_7, %c0_8] : memref<16x128xf32, #tpu.memory_space<vmem>>, vector<16x128xf32>
    tpu.vector_store %arg3[%c0_7, %c0_8], %5 {strides = array<i32>} : memref<16x128xf32, #tpu.memory_space<vmem>>, vector<16x128xf32>,
    return
  }
  func.func @transform_1(%arg0: i32, %arg1: memref<16xi32, #tpu.memory_space<smem>>) -> (i32, i32) {
    %c0_i32 = arith.constant 0 : i32
    %c0_i32_0 = arith.constant 0 : i32
    return %arg0, %c0_i32 : i32, i32
  }
}

</mosaic_0001>

<llo_original>
// kernel: tpu_custom_call.1
$region0: #{tpu_custom_call.1}
  #allocation0 [shape = 'u32[]', space=smem, size = 0x4, offset = 0x4, fixed_abs, tag = 'smem constant byte address 0x4 - core index']
  #allocation1 [shape = 'u32[72,128]{1,0:T(1,128)}', space=vmem, size = 0x9000, scoped, tag = 'internal scratch']
  #allocation2 [shape = 'f32[16,128]{1,0:T(8,128)}', space=vmem, size = 0x2000, scoped, tag = 'scratch operand']
  #allocation3 [shape = 's32[1]{0}', space=sflag, size = 0x4, scoped, tag = 'scratch operand']
  #allocation4 [shape = 's32[1]{0}', space=sflag, size = 0x4, scoped, tag = 'scoped memory for tpu_custom_call.1']
  #allocation5 [shape = 'u8[512]{0}', space=smem, size = 0x200, scoped, tag = 'prefetched SMEM operand 0']
  #allocation8 [shape = 's32[]', space=sflag, size = 0x4, offset = 0, fixed_abs, tag = 'sflag constant byte address 0x0 - dummy sync flag']
  #allocation9 [shape = 's32[]', space=sflag, size = 0x4, offset = 0, fixed_abs, tag = 'sflag constant byte address 0x0 - dummy sync flag']
  #allocation10 [shape = 'u32[]', space=smem, size = 0x4, offset = 0x44, fixed_abs, tag = 'smem constant byte address 0x44 - assertion arg 0']
  #allocation11 [shape = 'u32[]', space=smem, size = 0x4, offset = 0x48, fixed_abs, tag = 'smem constant byte address 0x48 - assertion arg 1']
  %s0 = inlined_call_operand.hbm [shape: s32[16], index: 0, kind: input, shape index: {}]
  %s1 = inlined_call_operand.hbm [shape: f32[32,128], index: 1, kind: input, shape index: {}]
  %s2 = inlined_call_operand.hbm [shape: f32[16,128], index: 2, kind: output, shape index: {}]
  %s3 = sld [smem:[#allocation0]]
  $region28: #{tpu_custom_call.1} parent=0
    _
  %s5 = ssub.s32 1, %s3
  %s6 = scalar_select 0, %s5, %s3
  %s8 = sshll.u32 %s0, 4
  %s9 = int_to_ptr.hbm [resolvable:$true] %s8
  %11 = dma.hbm_to_smem %s9, 16, [#allocation5], [#allocation4]
  %13 = dma.done [#allocation4], 16
  %14 = sfence
  $region1: #{tpu_custom_call.1} parent=0
    #allocation6 [shape = 'u8[8192]{0}', space=vmem, size = 0x2000, scoped, tag = 'output window, operand 0, single buffered']
    #allocation7 [shape = 's32[1]{0}', space=sflag, size = 0x4, scoped, tag = 'scoped memory for tpu_custom_call.1']
    %15 = vsyncpa [#allocation7], 0
    %s16 = smul.u32 0, 16
    loop: start=0, step=1, limit=16
    $region2: #{tpu_custom_call.1} parent=1 // loop_pre_header
      _
    $region3: #{tpu_custom_call.1} parent=1 // loop_header
      %s18 = sphi 0, %s22
      %p19 = scmp.ge.s32.totalorder %s18, 16
    $region4: #{tpu_custom_call.1} parent=1 // loop_header_branch
      %21 = sbr.rel (%p19) target = $region8
    $region5: #{tpu_custom_call.1} parent=1 // loop_body
      %s23 = sadd.s32 %s16, %s18
      %s24 = sld [smem:[#allocation5 + %s23]]
      %s25 = scalar_lea.hbm %s1, %s24
      %s26 = scalar_lea.vmem [#allocation2], %s18
      // Predicated region
      $region9: #{tpu_custom_call.1} parent=5 // pred_check
        _
      $region10: #{tpu_custom_call.1} parent=5 // pred_check_branch
        %28 = sbr.rel target = $region12
      $region11: #{tpu_custom_call.1} parent=5 // pred_region
        %29 = sst [smem:[#allocation10]] [#allocation9]
        %30 = sst [smem:[#allocation11]] [#allocation8]
      $region12: #{tpu_custom_call.1} parent=5 // pred_fallthru
        _
      %32 = shalt.err (0)
      %s34 = sshll.u32 %s25, 4
      %s35 = int_to_ptr.hbm [resolvable:$true] %s34
      %s36 = sshll.u32 %s26, 4
      %s37 = int_to_ptr.vmem [resolvable:$true] %s36
      %39 = dma.hbm_to_vmem [thread:$0]  %s35, 16, %s37, [#allocation3]
    $region6: #{tpu_custom_call.1} parent=1 // loop_footer
      %s22 = sadd.s32 1, %s18
    $region7: #{tpu_custom_call.1} parent=1 // loop_footer_branch
      %17 = sbr.rel target = $region3
    $region8: #{tpu_custom_call.1} parent=1 // loop_exit
      _
    loop: start=0, step=1, limit=16
    $region13: #{tpu_custom_call.1} parent=1 // loop_pre_header
      _
    $region14: #{tpu_custom_call.1} parent=1 // loop_header
      %s41 = sphi 0, %s45
      %p42 = scmp.ge.s32.totalorder %s41, 16
    $region15: #{tpu_custom_call.1} parent=1 // loop_header_branch
      %44 = sbr.rel (%p42) target = $region19
    $region16: #{tpu_custom_call.1} parent=1 // loop_body
      %47 = dma.done [#allocation3], 16
    $region17: #{tpu_custom_call.1} parent=1 // loop_footer
      %s45 = sadd.s32 1, %s41
    $region18: #{tpu_custom_call.1} parent=1 // loop_footer_branch
      %40 = sbr.rel target = $region14
    $region19: #{tpu_custom_call.1} parent=1 // loop_exit
      _
    %v48 = vld [vmem:[#allocation2] sm:$0xff]
    %v49 = vld [vmem:[#allocation2 + $0x8] sm:$0xff]
    %v50 = vmul.f32 %v48, 11.313708
    %v51 = vmul.f32 %v49, 11.313708
    %52 = vst [vmem:[#allocation6] sm:$0xff] %v50
    %53 = vst [vmem:[#allocation6 + $0x8] sm:$0xff] %v51
    // Predicated region
    $region20: #{tpu_custom_call.1} parent=1 // pred_check
      _
    $region21: #{tpu_custom_call.1} parent=1 // pred_check_branch
      %55 = sbr.rel (0) target = $region23
    $region22: #{tpu_custom_call.1} parent=1 // pred_region
      %57 = vsyncadd [#allocation7], 0
      %s58 = sshll.u32 [#allocation6], 4
      %s59 = int_to_ptr.vmem [resolvable:$true] %s58
      %s60 = sshll.u32 %s2, 4
      %s61 = int_to_ptr.hbm [resolvable:$true] %s60
      %66 = dma.vmem_to_hbm [thread:$0]  %s59, 256, %s61, [#allocation7], 128, 128, 8
    $region23: #{tpu_custom_call.1} parent=1 // pred_fallthru
      _
    // Predicated region
    $region24: #{tpu_custom_call.1} parent=1 // pred_check
      _
    $region25: #{tpu_custom_call.1} parent=1 // pred_check_branch
      %68 = sbr.rel (0) target = $region27
    $region26: #{tpu_custom_call.1} parent=1 // pred_region
      %70 = dma.done [#allocation7], 256
    $region27: #{tpu_custom_call.1} parent=1 // pred_fallthru
      _
    %71 = vsyncpa [#allocation7], 1
  %72 = vsyncmov [#allocation3]
  %s73 = vpop.sfrf %72
  %p74 = scmp.eq.s32.totalorder %s73, 0
  %p75 = pneg %p74
  %77 = shalt.err (%p75)

</llo_original>
